<compile_context>
chip_gen: v7x
topology: tpu7x:2x2x1
jax: 0.10.0
libtpu: 0.0.40
codegen_flags: <defaults>
</compile_context>

<pallas_src>
import math
import numpy as np
import jax
import jax.numpy as jnp
from jax.experimental import pallas as pl
from jax.experimental.pallas import tpu as pltpu

# ---------------- small synthetic configuration ----------------
BATCH = 1            # final reshape(1, qlen, -1) in the module assumes batch == 1
KLEN = 4             # klen = k.shape[1] // 32
FRAMES = 32          # hardcoded in k.reshape(B, klen, 32, 768)
FEAT = 768           # hardcoded
N_HEADS = 2
HEAD_SIZE = 16       # d_head
HID = N_HEADS * HEAD_SIZE
QLEN = 8
N_BASIS = 16         # attn_num_basis
NUM_POINTS = 1000    # hardcoded in expected_value / compute_probability
RIDGE = 0.5          # ridge_penalty


# ---------------- basis-function setup (numpy glue, mirrors get_basis) ----------------
def _rect_basis_params(nb):
    width = np.ones((nb,), np.float32) / nb
    edges = np.linspace(0.0, 1.0, nb + 1, dtype=np.float32)
    mu = ((edges[:-1] + edges[1:]) / 2.0).astype(np.float32)
    return mu, width


def _rect_eval(t, mu, width):
    # psi[j](t) indicator basis, evaluated for a vector of points t -> (len(t), N)
    return (np.abs(t[:, None] - mu[None, :]) <= (width[None, :] / 2.0)).astype(np.float32)


def _compute_G(l, mu, width, padding=True):
    # Mirrors LongTermAttention.get_basis / compute_G (linear spacing, padding).
    if padding:
        if l % 2:
            shift = 1.0 / float(l)
            positions = np.linspace(-0.5 + shift, 1.5 - shift, 2 * l - 1, dtype=np.float32)
        else:
            shift = 1.0 / float(2 * l)
            positions = np.linspace(-0.5 + shift, 1.5 - shift, 2 * l, dtype=np.float32)
    else:
        shift = 1.0 / float(2 * l)
        positions = np.linspace(shift, 1.0 - shift, l, dtype=np.float32)
    F = _rect_eval(positions, mu, width).T                      # (N, P)
    I = np.eye(F.shape[0], dtype=np.float32)
    G = F.T @ np.linalg.inv(F @ F.T + RIDGE * I)                # (P, N)
    if padding:
        if l % 2:
            G = G[(l - 1) // 2: -((l - 1) // 2)]
        else:
            G = G[l // 2: -(l // 2)]
    return G.astype(np.float32)                                 # (l, N)


def build_constants(klen):
    """Setup-time constants: bf16 G matrix (frame-mean folded) + collapsed trapezoid weights."""
    mu, width = _rect_basis_params(N_BASIS)
    G = _compute_G(klen, mu, width, padding=True)               # (klen, N)
    # fold the 32-frame mean into G: G_rep[l*32+j, n] = G[l, n] / 32
    g_rep = np.repeat(G, FRAMES, axis=0) / np.float32(FRAMES)   # (klen*32, N)
    grT = np.ascontiguousarray(g_rep.T)                         # (N, klen*32)

    # Collapse the 1000-point trapezoid integration onto the basis buckets.
    t = np.linspace(0.0, 1.0, NUM_POINTS, dtype=np.float32)
    psi = _rect_eval(t, mu, width)                              # (T, N)
    dt = np.diff(t)
    w = np.zeros((NUM_POINTS,), np.float32)
    w[:-1] += dt / 2.0
    w[1:] += dt / 2.0
    # Exactness condition: each integration point activates exactly one basis function.
    assert np.all(psi.sum(axis=1) == 1.0), \
        "rectangular basis rows are not one-hot on the integration grid; " \
        "the collapsed integration path would be inexact"
    # Psi^T diag(w) Psi is diagonal under the one-hot condition, with diagonal wsum.
    wsum = (psi.T @ w).astype(np.float32).reshape(1, N_BASIS)   # (1, N)

    return jnp.asarray(grT, dtype=jnp.bfloat16), jnp.asarray(wsum, dtype=jnp.float32)


# ---------------- fused kernel: frame-mean + proj + continuous attention ----------------
def _fused_lta_kernel(x_ref, grT_ref, wkv_ref, bkv_ref, q_ref, wsum_ref, o_ref):
    # x_ref   : (1, klen*32, 768) f32     grT_ref : (N, klen*32) bf16  == (G_rep/32)^T
    # wkv_ref : (768, 2*HID) bf16         bkv_ref : (1, 2*HID)   f32
    # q_ref   : (1, QLEN, HID) f32        wsum_ref: (1, N)       f32 (collapsed trapz weights)
    # o_ref   : (1, QLEN, HID) f32

    # ---- memory projection: B^T = G_rep^T @ x  (frame-mean folded into G_rep) ----
    x = x_ref[0].astype(jnp.bfloat16)                                   # cast in-kernel (no extra HBM pass)
    Bt = jnp.dot(grT_ref[...], x, preferred_element_type=jnp.float32)   # (N, 768) f32 accum

    # ---- fused key/value projection (bf16 operands, f32 accumulate) ----
    kv = jnp.dot(Bt.astype(jnp.bfloat16), wkv_ref[...],
                 preferred_element_type=jnp.float32) + bkv_ref[...]     # (N, 2*HID)
    keys = kv[:, :HID]                                                  # (N, HID)
    vals = kv[:, HID:]                                                  # (N, HID)

    q = q_ref[0]                                                        # (QLEN, HID) f32
    wsum = wsum_ref[...]                                                # (1, N)
    scale = jnp.float32(1.0 / math.sqrt(HEAD_SIZE))

    # ---- continuous attention, integration axis collapsed onto the basis buckets ----
    ctxs = []
    for h in range(N_HEADS):                                            # static 2-iteration loop
        sl = slice(h * HEAD_SIZE, (h + 1) * HEAD_SIZE)
        qh = q[:, sl]                                                   # (Q, D)
        kh = keys[:, sl]                                                # (N, D)
        vh = vals[:, sl]                                                # (N, D)

        # NT matmul (contract d with d) -- no explicit kh.T relayout; scale applied post-matmul
        qk = jax.lax.dot_general(qh, kh, (((1,), (1,)), ((), ())),
                                 preferred_element_type=jnp.float32) * scale   # (Q, N)

        # max over the REAL scores only (no padded columns); cancels exactly in p(t)
        m = jnp.max(qk, axis=-1, keepdims=True)                         # (Q, 1)
        e = jnp.exp(qk - m)                                             # (Q, N)
        ew = e * wsum                                                   # == trapz weights folded in
        z = jnp.sum(ew, axis=-1, keepdims=True)                         # trapz_t exp(scores)
        p = ew * pl.reciprocal(z, approx=False)                         # trapz_t p(t) Psi(t)
        ctxs.append(jnp.dot(p, vh, preferred_element_type=jnp.float32)) # (Q, D)

    # heads concatenated along features == context.transpose(1,2).reshape(...)
    o_ref[0] = jnp.concatenate(ctxs, axis=-1)                           # (Q, HID)


# ---------------- wrappers ----------------
@jax.jit
def _lta_pallas(k, q, wkv_bf16, bkv, grT_bf16, wsum):
    batch, total, feat = k.shape
    qlen = q.shape[1]

    out = pl.pallas_call(
        _fused_lta_kernel,
        grid=(batch,),
        in_specs=[
            pl.BlockSpec((1, total, feat), lambda b: (b, 0, 0)),
            pl.BlockSpec((N_BASIS, total), lambda b: (0, 0)),
            pl.BlockSpec((feat, 2 * HID), lambda b: (0, 0)),
            pl.BlockSpec((1, 2 * HID), lambda b: (0, 0)),
            pl.BlockSpec((1, qlen, HID), lambda b: (b, 0, 0)),
            pl.BlockSpec((1, N_BASIS), lambda b: (0, 0)),
        ],
        out_specs=pl.BlockSpec((1, qlen, HID), lambda b: (b, 0, 0)),
        out_shape=jax.ShapeDtypeStruct((batch, qlen, HID), jnp.float32),
        compiler_params=pltpu.CompilerParams(dimension_semantics=("parallel",)),
    )(k, grT_bf16, wkv_bf16, bkv, q, wsum)

    # context is already in (B, Q, H*D) layout; final reshape matches reshape(1, qlen, -1)
    return out.reshape(1, qlen, -1)


def long_term_attention_forward(k, q, wk, bk, wv, bv):
    klen = k.shape[1] // FRAMES
    grT_bf16, wsum = build_constants(klen)
    # setup-time weight fusion + bf16 cast (done once; halves the weight HBM read per call)
    wkv_bf16 = jnp.concatenate([wk, wv], axis=1).astype(jnp.bfloat16)   # (768, 2*HID)
    bkv = jnp.concatenate([bk, bv], axis=1).astype(jnp.float32)         # (1, 2*HID)
    return _lta_pallas(k, q, wkv_bf16, bkv, grT_bf16, wsum)


if __name__ == "__main__":
    key = jax.random.PRNGKey(0)
    k1, k2, k3, k4, k5, k6 = jax.random.split(key, 6)

    # inputs consistent with the module's forward (k has klen*32 tokens of dim 768)
    k_in = jax.random.normal(k1, (BATCH, KLEN * FRAMES, FEAT), jnp.float32)
    q_in = jax.random.normal(k2, (BATCH, QLEN, HID), jnp.float32)

    # deterministic "proj_key" / "proj_value" Linear(768 -> n_head*head_size) params
    wk = jax.random.normal(k3, (FEAT, HID), jnp.float32) / math.sqrt(FEAT)
    bk = 0.01 * jax.random.normal(k4, (1, HID), jnp.float32)
    wv = jax.random.normal(k5, (FEAT, HID), jnp.float32) / math.sqrt(FEAT)
    bv = 0.01 * jax.random.normal(k6, (1, HID), jnp.float32)

    out = long_term_attention_forward(k_in, q_in, wk, bk, wv, bv)
    jax.block_until_ready(out)

    assert out.shape == (1, QLEN, N_HEADS * HEAD_SIZE), out.shape
    assert bool(jnp.all(jnp.isfinite(out)))
    print("KERNEL_OK")
</pallas_src>

<mosaic_0001>
module attributes {stable_mosaic.version = 11 : i64} {
  func.func @_fused_lta_kernel(%arg0: i32, %arg1: memref<1x128x768xf32, #tpu.memory_space<vmem>>, %arg2: memref<16x128xbf16, #tpu.memory_space<vmem>>, %arg3: memref<768x64xbf16, #tpu.memory_space<vmem>>, %arg4: memref<1x64xf32, #tpu.memory_space<vmem>>, %arg5: memref<1x8x32xf32, #tpu.memory_space<vmem>>, %arg6: memref<1x16xf32, #tpu.memory_space<vmem>>, %arg7: memref<1x8x32xf32, #tpu.memory_space<vmem>>) attributes {dimension_semantics = [#tpu.dimension_semantics<parallel>], iteration_bounds = array<i64: 1>, scalar_prefetch = 0 : i64, scratch_operands = 0 : i64, tpu.core_type = #tpu.core_type<tc>, window_params = [{transform_indices = @transform_0, window_bounds = array<i64: 1, 128, 768>}, {pipeline_mode = #tpu.pipeline_mode<synchronous>, transform_indices = @transform_1, window_bounds = array<i64: 16, 128>}, {pipeline_mode = #tpu.pipeline_mode<synchronous>, transform_indices = @transform_2, window_bounds = array<i64: 768, 64>}, {pipeline_mode = #tpu.pipeline_mode<synchronous>, transform_indices = @transform_3, window_bounds = array<i64: 1, 64>}, {transform_indices = @transform_4, window_bounds = array<i64: 1, 8, 32>}, {pipeline_mode = #tpu.pipeline_mode<synchronous>, transform_indices = @transform_5, window_bounds = array<i64: 1, 16>}, {transform_indices = @transform_6, window_bounds = array<i64: 1, 8, 32>}]} {
    %c0 = arith.constant 0 : index
    %c0_0 = arith.constant 0 : index
    %c0_1 = arith.constant 0 : index
    %0 = vector.load %arg1[%c0, %c0_0, %c0_1] : memref<1x128x768xf32, #tpu.memory_space<vmem>>, vector<1x128x768xf32>
    %1 = vector.shape_cast %0 : vector<1x128x768xf32> to vector<128x768xf32>
    %2 = arith.truncf %1 : vector<128x768xf32> to vector<128x768xbf16>
    %c0_2 = arith.constant 0 : index
    %c0_3 = arith.constant 0 : index
    %3 = vector.load %arg2[%c0_2, %c0_3] : memref<16x128xbf16, #tpu.memory_space<vmem>>, vector<16x128xbf16>
    %cst = arith.constant dense<0.000000e+00> : vector<16x768xf32>
    %4 = tpu.matmul %3, %2, %cst {dimension_numbers = #tpu.dot_dimension_numbers<[1], [0], [0], [1], [0, 0, 1, 1], [], []>} : vector<16x128xbf16>, vector<128x768xbf16>, vector<16x768xf32> -> vector<16x768xf32>
    %5 = arith.truncf %4 : vector<16x768xf32> to vector<16x768xbf16>
    %c0_4 = arith.constant 0 : index
    %c0_5 = arith.constant 0 : index
    %6 = vector.load %arg3[%c0_4, %c0_5] : memref<768x64xbf16, #tpu.memory_space<vmem>>, vector<768x64xbf16>
    %cst_6 = arith.constant dense<0.000000e+00> : vector<16x64xf32>
    %7 = tpu.matmul %5, %6, %cst_6 {dimension_numbers = #tpu.dot_dimension_numbers<[1], [0], [0], [1], [0, 0, 1, 1], [], []>} : vector<16x768xbf16>, vector<768x64xbf16>, vector<16x64xf32> -> vector<16x64xf32>
    %c0_7 = arith.constant 0 : index
    %c0_8 = arith.constant 0 : index
    %8 = vector.load %arg4[%c0_7, %c0_8] : memref<1x64xf32, #tpu.memory_space<vmem>>, vector<1x64xf32>
    %9 = vector.broadcast %8 : vector<1x64xf32> to vector<16x64xf32>
    %10 = arith.addf %7, %9 : vector<16x64xf32>
    %11 = vector.extract_strided_slice %10 {offsets = [0, 0], sizes = [16, 32], strides = [1, 1]} : vector<16x64xf32> to vector<16x32xf32>
    %12 = vector.extract_strided_slice %10 {offsets = [0, 32], sizes = [16, 32], strides = [1, 1]} : vector<16x64xf32> to vector<16x32xf32>
    %c0_9 = arith.constant 0 : index
    %c0_10 = arith.constant 0 : index
    %c0_11 = arith.constant 0 : index
    %13 = vector.load %arg5[%c0_9, %c0_10, %c0_11] : memref<1x8x32xf32, #tpu.memory_space<vmem>>, vector<1x8x32xf32>
    %14 = vector.shape_cast %13 : vector<1x8x32xf32> to vector<8x32xf32>
    %c0_12 = arith.constant 0 : index
    %c0_13 = arith.constant 0 : index
    %15 = vector.load %arg6[%c0_12, %c0_13] : memref<1x16xf32, #tpu.memory_space<vmem>>, vector<1x16xf32>
    %16 = vector.extract_strided_slice %14 {offsets = [0, 0], sizes = [8, 16], strides = [1, 1]} : vector<8x32xf32> to vector<8x16xf32>
    %17 = vector.extract_strided_slice %11 {offsets = [0, 0], sizes = [16, 16], strides = [1, 1]} : vector<16x32xf32> to vector<16x16xf32>
    %18 = vector.extract_strided_slice %12 {offsets = [0, 0], sizes = [16, 16], strides = [1, 1]} : vector<16x32xf32> to vector<16x16xf32>
    %cst_14 = arith.constant dense<0.000000e+00> : vector<8x16xf32>
    %19 = tpu.matmul %16, %17, %cst_14 {dimension_numbers = #tpu.dot_dimension_numbers<[1], [1], [0], [0], [0, 0, 1, 0], [], []>} : vector<8x16xf32>, vector<16x16xf32>, vector<8x16xf32> -> vector<8x16xf32>
    %cst_15 = arith.constant 2.500000e-01 : f32
    %20 = vector.broadcast %cst_15 : f32 to vector<8x16xf32>
    %21 = arith.mulf %19, %20 : vector<8x16xf32>
    %cst_16 = arith.constant dense<0xFF800000> : vector<8xf32>
    %22 = vector.multi_reduction <maximumf>, %21, %cst_16 [1] : vector<8x16xf32> to vector<8xf32>
    %23 = vector.shape_cast %22 : vector<8xf32> to vector<8x1xf32>
    %24 = vector.broadcast %23 : vector<8x1xf32> to vector<8x16xf32>
    %25 = arith.subf %21, %24 : vector<8x16xf32>
    %26 = math.exp %25 : vector<8x16xf32>
    %27 = vector.broadcast %15 : vector<1x16xf32> to vector<8x16xf32>
    %28 = arith.mulf %26, %27 : vector<8x16xf32>
    %cst_17 = arith.constant dense<0.000000e+00> : vector<8xf32>
    %29 = vector.multi_reduction <add>, %28, %cst_17 [1] : vector<8x16xf32> to vector<8xf32>
    %30 = vector.shape_cast %29 : vector<8xf32> to vector<8x1xf32>
    %31 = tpu.reciprocal %30 : vector<8x1xf32> -> vector<8x1xf32>
    %32 = vector.broadcast %31 : vector<8x1xf32> to vector<8x16xf32>
    %33 = arith.mulf %28, %32 : vector<8x16xf32>
    %cst_18 = arith.constant dense<0.000000e+00> : vector<8x16xf32>
    %34 = tpu.matmul %33, %18, %cst_18 {dimension_numbers = #tpu.dot_dimension_numbers<[1], [0], [0], [1], [0, 0, 1, 1], [], []>} : vector<8x16xf32>, vector<16x16xf32>, vector<8x16xf32> -> vector<8x16xf32>
    %35 = vector.extract_strided_slice %14 {offsets = [0, 16], sizes = [8, 16], strides = [1, 1]} : vector<8x32xf32> to vector<8x16xf32>
    %36 = vector.extract_strided_slice %11 {offsets = [0, 16], sizes = [16, 16], strides = [1, 1]} : vector<16x32xf32> to vector<16x16xf32>
    %37 = vector.extract_strided_slice %12 {offsets = [0, 16], sizes = [16, 16], strides = [1, 1]} : vector<16x32xf32> to vector<16x16xf32>
    %cst_19 = arith.constant dense<0.000000e+00> : vector<8x16xf32>
    %38 = tpu.matmul %35, %36, %cst_19 {dimension_numbers = #tpu.dot_dimension_numbers<[1], [1], [0], [0], [0, 0, 1, 0], [], []>} : vector<8x16xf32>, vector<16x16xf32>, vector<8x16xf32> -> vector<8x16xf32>
    %cst_20 = arith.constant 2.500000e-01 : f32
    %39 = vector.broadcast %cst_20 : f32 to vector<8x16xf32>
    %40 = arith.mulf %38, %39 : vector<8x16xf32>
    %cst_21 = arith.constant dense<0xFF800000> : vector<8xf32>
    %41 = vector.multi_reduction <maximumf>, %40, %cst_21 [1] : vector<8x16xf32> to vector<8xf32>
    %42 = vector.shape_cast %41 : vector<8xf32> to vector<8x1xf32>
    %43 = vector.broadcast %42 : vector<8x1xf32> to vector<8x16xf32>
    %44 = arith.subf %40, %43 : vector<8x16xf32>
    %45 = math.exp %44 : vector<8x16xf32>
    %46 = vector.broadcast %15 : vector<1x16xf32> to vector<8x16xf32>
    %47 = arith.mulf %45, %46 : vector<8x16xf32>
    %cst_22 = arith.constant dense<0.000000e+00> : vector<8xf32>
    %48 = vector.multi_reduction <add>, %47, %cst_22 [1] : vector<8x16xf32> to vector<8xf32>
    %49 = vector.shape_cast %48 : vector<8xf32> to vector<8x1xf32>
    %50 = tpu.reciprocal %49 : vector<8x1xf32> -> vector<8x1xf32>
    %51 = vector.broadcast %50 : vector<8x1xf32> to vector<8x16xf32>
    %52 = arith.mulf %47, %51 : vector<8x16xf32>
    %cst_23 = arith.constant dense<0.000000e+00> : vector<8x16xf32>
    %53 = tpu.matmul %52, %37, %cst_23 {dimension_numbers = #tpu.dot_dimension_numbers<[1], [0], [0], [1], [0, 0, 1, 1], [], []>} : vector<8x16xf32>, vector<16x16xf32>, vector<8x16xf32> -> vector<8x16xf32>
    %54 = tpu.concatenate %34, %53 in 1 : vector<8x16xf32>, vector<8x16xf32> -> vector<8x32xf32>
    %c0_24 = arith.constant 0 : index
    %c0_25 = arith.constant 0 : index
    %c0_26 = arith.constant 0 : index
    %55 = vector.load %arg7[%c0_24, %c0_25, %c0_26] : memref<1x8x32xf32, #tpu.memory_space<vmem>>, vector<1x8x32xf32>
    %56 = vector.shape_cast %55 : vector<1x8x32xf32> to vector<8x32xf32>
    %57 = vector.shape_cast %54 : vector<8x32xf32> to vector<1x8x32xf32>
    tpu.vector_store %arg7[%c0_24, %c0_25, %c0_26], %57 {strides = array<i32>} : memref<1x8x32xf32, #tpu.memory_space<vmem>>, vector<1x8x32xf32>,
    return
  }
  func.func @transform_0(%arg0: i32) -> (i32, i32, i32) {
    %c0_i32 = arith.constant 0 : i32
    %c0_i32_0 = arith.constant 0 : i32
    %c0_i32_1 = arith.constant 0 : i32
    return %arg0, %c0_i32, %c0_i32_0 : i32, i32, i32
  }
  func.func @transform_1(%arg0: i32) -> (i32, i32) {
    %c0_i32 = arith.constant 0 : i32
    %c0_i32_0 = arith.constant 0 : i32
    %c0_i32_1 = arith.constant 0 : i32
    return %c0_i32, %c0_i32_0 : i32, i32
  }
  func.func @transform_2(%arg0: i32) -> (i32, i32) {
    %c0_i32 = arith.constant 0 : i32
    %c0_i32_0 = arith.constant 0 : i32
    %c0_i32_1 = arith.constant 0 : i32
    return %c0_i32, %c0_i32_0 : i32, i32
  }
  func.func @transform_3(%arg0: i32) -> (i32, i32) {
    %c0_i32 = arith.constant 0 : i32
    %c0_i32_0 = arith.constant 0 : i32
    %c0_i32_1 = arith.constant 0 : i32
    return %c0_i32, %c0_i32_0 : i32, i32
  }
  func.func @transform_4(%arg0: i32) -> (i32, i32, i32) {
    %c0_i32 = arith.constant 0 : i32
    %c0_i32_0 = arith.constant 0 : i32
    %c0_i32_1 = arith.constant 0 : i32
    return %arg0, %c0_i32, %c0_i32_0 : i32, i32, i32
  }
  func.func @transform_5(%arg0: i32) -> (i32, i32) {
    %c0_i32 = arith.constant 0 : i32
    %c0_i32_0 = arith.constant 0 : i32
    %c0_i32_1 = arith.constant 0 : i32
    return %c0_i32, %c0_i32_0 : i32, i32
  }
  func.func @transform_6(%arg0: i32) -> (i32, i32, i32) {
    %c0_i32 = arith.constant 0 : i32
    %c0_i32_0 = arith.constant 0 : i32
    %c0_i32_1 = arith.constant 0 : i32
    return %arg0, %c0_i32, %c0_i32_0 : i32, i32, i32
  }
}

</mosaic_0001>

<llo_original>
// kernel: _lta_pallas.1
$region0: #{_lta_pallas.1}
  #allocation0 [shape = 'u32[]', space=smem, size = 0x4, offset = 0x4, fixed_abs, tag = 'smem constant byte address 0x4 - core index']
  #allocation1 [shape = 'u32[144,128]{1,0:T(1,128)}', space=vmem, size = 0x12000, scoped, tag = 'internal scratch']
  %s0 = inlined_call_operand.hbm [shape: f32[1,128,768], index: 0, kind: input, shape index: {}]
  %s1 = inlined_call_operand.vmem [shape: bf16[16,128], index: 1, kind: input, shape index: {}]
  %s2 = inlined_call_operand.vmem [shape: bf16[768,64], index: 2, kind: input, shape index: {}]
  %s3 = inlined_call_operand.vmem [shape: f32[1,64], index: 3, kind: input, shape index: {}]
  %s4 = inlined_call_operand.vmem [shape: f32[1,8,32], index: 4, kind: input, shape index: {}]
  %s5 = inlined_call_operand.vmem [shape: f32[1,16], index: 5, kind: input, shape index: {}]
  %s6 = inlined_call_operand.hbm [shape: f32[1,8,32], index: 6, kind: output, shape index: {}]
  %s7 = sld [smem:[#allocation0]]
  $region38: #{_lta_pallas.1} parent=0
    _
  %s9 = ssub.s32 1, %s7
  %s10 = scalar_select 0, %s9, %s7
  $region1: #{_lta_pallas.1} parent=0
    #allocation2 [shape = 'u8[393216]{0}', space=vmem, size = 0x60000, scoped, tag = 'input window, operand 0, single buffered']
    #allocation3 [shape = 's32[1]{0}', space=sflag, size = 0x4, scoped, tag = 'scoped memory for _lta_pallas.1']
    #allocation4 [shape = 's32[1]{0}', space=sflag, size = 0x4, scoped, tag = 'scoped memory for _lta_pallas.1']
    #allocation5 [shape = 'u8[4096]{0}', space=vmem, size = 0x1000, scoped, tag = 'output window, operand 0, single buffered']
    %11 = vsyncpa [#allocation3], 0
    %12 = vsyncpa [#allocation4], 0
    // Predicated region
    $region2: #{_lta_pallas.1} parent=1 // pred_check
      _
    $region3: #{_lta_pallas.1} parent=1 // pred_check_branch
      %14 = sbr.rel (0) target = $region5
    $region4: #{_lta_pallas.1} parent=1 // pred_region
      %s16 = ssub.s32 12288, 12288
      %17 = vsyncadd [#allocation3], %s16
      %s18 = sshll.u32 [#allocation2], 4
      %s19 = int_to_ptr.vmem [resolvable:$true] %s18
      %24 = dma.hbm_to_vmem [thread:$0]  %s0, 12288, %s19, [#allocation3], 768, 768, 48
    $region5: #{_lta_pallas.1} parent=1 // pred_fallthru
      _
    // Predicated region
    $region6: #{_lta_pallas.1} parent=1 // pred_check
      _
    $region7: #{_lta_pallas.1} parent=1 // pred_check_branch
      %26 = sbr.rel (0) target = $region9
    $region8: #{_lta_pallas.1} parent=1 // pred_region
      _
    $region9: #{_lta_pallas.1} parent=1 // pred_fallthru
      _
    // Predicated region
    $region10: #{_lta_pallas.1} parent=1 // pred_check
      _
    $region11: #{_lta_pallas.1} parent=1 // pred_check_branch
      %28 = sbr.rel (0) target = $region13
    $region12: #{_lta_pallas.1} parent=1 // pred_region
      _
    $region13: #{_lta_pallas.1} parent=1 // pred_fallthru
      _
    // Predicated region
    $region14: #{_lta_pallas.1} parent=1 // pred_check
      _
    $region15: #{_lta_pallas.1} parent=1 // pred_check_branch
      %30 = sbr.rel (0) target = $region17
    $region16: #{_lta_pallas.1} parent=1 // pred_region
      _
    $region17: #{_lta_pallas.1} parent=1 // pred_fallthru
      _
    // Predicated region
    $region18: #{_lta_pallas.1} parent=1 // pred_check
      _
    $region19: #{_lta_pallas.1} parent=1 // pred_check_branch
      %32 = sbr.rel (0) target = $region21
    $region20: #{_lta_pallas.1} parent=1 // pred_region
      _
    $region21: #{_lta_pallas.1} parent=1 // pred_fallthru
      _
    // Predicated region
    $region22: #{_lta_pallas.1} parent=1 // pred_check
      _
    $region23: #{_lta_pallas.1} parent=1 // pred_check_branch
      %34 = sbr.rel (0) target = $region25
    $region24: #{_lta_pallas.1} parent=1 // pred_region
      _
    $region25: #{_lta_pallas.1} parent=1 // pred_fallthru
      _
    // Predicated region
    $region26: #{_lta_pallas.1} parent=1 // pred_check
      _
    $region27: #{_lta_pallas.1} parent=1 // pred_check_branch
      %36 = sbr.rel (0) target = $region29
    $region28: #{_lta_pallas.1} parent=1 // pred_region
      %37 = dma.done [#allocation3], 12288
    $region29: #{_lta_pallas.1} parent=1 // pred_fallthru
      _
    %v39 = vld [vmem:[#allocation2] sm:$0xff]
    %v40 = vld [vmem:[#allocation2 + $0x8] sm:$0xff]
    %v41 = vld [vmem:[#allocation2 + $0x10] sm:$0xff]
    %v42 = vld [vmem:[#allocation2 + $0x18] sm:$0xff]
    %v43 = vld [vmem:[#allocation2 + $0x20] sm:$0xff]
    %v44 = vld [vmem:[#allocation2 + $0x28] sm:$0xff]
    %v45 = vld [vmem:[#allocation2 + $0x30] sm:$0xff]
    %v46 = vld [vmem:[#allocation2 + $0x38] sm:$0xff]
    %v47 = vld [vmem:[#allocation2 + $0x40] sm:$0xff]
    %v48 = vld [vmem:[#allocation2 + $0x48] sm:$0xff]
    %v49 = vld [vmem:[#allocation2 + $0x50] sm:$0xff]
    %v50 = vld [vmem:[#allocation2 + $0x58] sm:$0xff]
    %v51 = vld [vmem:[#allocation2 + $0x60] sm:$0xff]
    %v52 = vld [vmem:[#allocation2 + $0x68] sm:$0xff]
    %v53 = vld [vmem:[#allocation2 + $0x70] sm:$0xff]
    %v54 = vld [vmem:[#allocation2 + $0x78] sm:$0xff]
    %v55 = vld [vmem:[#allocation2 + $0x80] sm:$0xff]
    %v56 = vld [vmem:[#allocation2 + $0x88] sm:$0xff]
    %v57 = vld [vmem:[#allocation2 + $0x90] sm:$0xff]
    %v58 = vld [vmem:[#allocation2 + $0x98] sm:$0xff]
    %v59 = vld [vmem:[#allocation2 + $0xa0] sm:$0xff]
    %v60 = vld [vmem:[#allocation2 + $0xa8] sm:$0xff]
    %v61 = vld [vmem:[#allocation2 + $0xb0] sm:$0xff]
    %v62 = vld [vmem:[#allocation2 + $0xb8] sm:$0xff]
    %v63 = vld [vmem:[#allocation2 + $0xc0] sm:$0xff]
    %v64 = vld [vmem:[#allocation2 + $0xc8] sm:$0xff]
    %v65 = vld [vmem:[#allocation2 + $0xd0] sm:$0xff]
    %v66 = vld [vmem:[#allocation2 + $0xd8] sm:$0xff]
    %v67 = vld [vmem:[#allocation2 + $0xe0] sm:$0xff]
    %v68 = vld [vmem:[#allocation2 + $0xe8] sm:$0xff]
    %v69 = vld [vmem:[#allocation2 + $0xf0] sm:$0xff]
    %v70 = vld [vmem:[#allocation2 + $0xf8] sm:$0xff]
    %v71 = vld [vmem:[#allocation2 + $0x100] sm:$0xff]
    %v72 = vld [vmem:[#allocation2 + $0x108] sm:$0xff]
    %v73 = vld [vmem:[#allocation2 + $0x110] sm:$0xff]
    %v74 = vld [vmem:[#allocation2 + $0x118] sm:$0xff]
    %v75 = vld [vmem:[#allocation2 + $0x120] sm:$0xff]
    %v76 = vld [vmem:[#allocation2 + $0x128] sm:$0xff]
    %v77 = vld [vmem:[#allocation2 + $0x130] sm:$0xff]
    %v78 = vld [vmem:[#allocation2 + $0x138] sm:$0xff]
    %v79 = vld [vmem:[#allocation2 + $0x140] sm:$0xff]
    %v80 = vld [vmem:[#allocation2 + $0x148] sm:$0xff]
    %v81 = vld [vmem:[#allocation2 + $0x150] sm:$0xff]
    %v82 = vld [vmem:[#allocation2 + $0x158] sm:$0xff]
    %v83 = vld [vmem:[#allocation2 + $0x160] sm:$0xff]
    %v84 = vld [vmem:[#allocation2 + $0x168] sm:$0xff]
    %v85 = vld [vmem:[#allocation2 + $0x170] sm:$0xff]
    %v86 = vld [vmem:[#allocation2 + $0x178] sm:$0xff]
    %v87 = vld [vmem:[#allocation2 + $0x180] sm:$0xff]
    %v88 = vld [vmem:[#allocation2 + $0x188] sm:$0xff]
    %v89 = vld [vmem:[#allocation2 + $0x190] sm:$0xff]
    %v90 = vld [vmem:[#allocation2 + $0x198] sm:$0xff]
    %v91 = vld [vmem:[#allocation2 + $0x1a0] sm:$0xff]
    %v92 = vld [vmem:[#allocation2 + $0x1a8] sm:$0xff]
    %v93 = vld [vmem:[#allocation2 + $0x1b0] sm:$0xff]
    %v94 = vld [vmem:[#allocation2 + $0x1b8] sm:$0xff]
    %v95 = vld [vmem:[#allocation2 + $0x1c0] sm:$0xff]
    %v96 = vld [vmem:[#allocation2 + $0x1c8] sm:$0xff]
    %v97 = vld [vmem:[#allocation2 + $0x1d0] sm:$0xff]
    %v98 = vld [vmem:[#allocation2 + $0x1d8] sm:$0xff]
    %v99 = vld [vmem:[#allocation2 + $0x1e0] sm:$0xff]
    %v100 = vld [vmem:[#allocation2 + $0x1e8] sm:$0xff]
    %v101 = vld [vmem:[#allocation2 + $0x1f0] sm:$0xff]
    %v102 = vld [vmem:[#allocation2 + $0x1f8] sm:$0xff]
    %v103 = vld [vmem:[#allocation2 + $0x200] sm:$0xff]
    %v104 = vld [vmem:[#allocation2 + $0x208] sm:$0xff]
    %v105 = vld [vmem:[#allocation2 + $0x210] sm:$0xff]
    %v106 = vld [vmem:[#allocation2 + $0x218] sm:$0xff]
    %v107 = vld [vmem:[#allocation2 + $0x220] sm:$0xff]
    %v108 = vld [vmem:[#allocation2 + $0x228] sm:$0xff]
    %v109 = vld [vmem:[#allocation2 + $0x230] sm:$0xff]
    %v110 = vld [vmem:[#allocation2 + $0x238] sm:$0xff]
    %v111 = vld [vmem:[#allocation2 + $0x240] sm:$0xff]
    %v112 = vld [vmem:[#allocation2 + $0x248] sm:$0xff]
    %v113 = vld [vmem:[#allocation2 + $0x250] sm:$0xff]
    %v114 = vld [vmem:[#allocation2 + $0x258] sm:$0xff]
    %v115 = vld [vmem:[#allocation2 + $0x260] sm:$0xff]
    %v116 = vld [vmem:[#allocation2 + $0x268] sm:$0xff]
    %v117 = vld [vmem:[#allocation2 + $0x270] sm:$0xff]
    %v118 = vld [vmem:[#allocation2 + $0x278] sm:$0xff]
    %v119 = vld [vmem:[#allocation2 + $0x280] sm:$0xff]
    %v120 = vld [vmem:[#allocation2 + $0x288] sm:$0xff]
    %v121 = vld [vmem:[#allocation2 + $0x290] sm:$0xff]
    %v122 = vld [vmem:[#allocation2 + $0x298] sm:$0xff]
    %v123 = vld [vmem:[#allocation2 + $0x2a0] sm:$0xff]
    %v124 = vld [vmem:[#allocation2 + $0x2a8] sm:$0xff]
    %v125 = vld [vmem:[#allocation2 + $0x2b0] sm:$0xff]
    %v126 = vld [vmem:[#allocation2 + $0x2b8] sm:$0xff]
    %v127 = vld [vmem:[#allocation2 + $0x2c0] sm:$0xff]
    %v128 = vld [vmem:[#allocation2 + $0x2c8] sm:$0xff]
    %v129 = vld [vmem:[#allocation2 + $0x2d0] sm:$0xff]
    %v130 = vld [vmem:[#allocation2 + $0x2d8] sm:$0xff]
    %v131 = vld [vmem:[#allocation2 + $0x2e0] sm:$0xff]
    %v132 = vld [vmem:[#allocation2 + $0x2e8] sm:$0xff]
    %v133 = vld [vmem:[#allocation2 + $0x2f0] sm:$0xff]
    %v134 = vld [vmem:[#allocation2 + $0x2f8] sm:$0xff]
    %v135 = vpack.c.bf16 %v45, %v39
    %v136 = vpack.c.bf16 %v46, %v40
    %v137 = vpack.c.bf16 %v47, %v41
    %v138 = vpack.c.bf16 %v48, %v42
    %v139 = vpack.c.bf16 %v49, %v43
    %v140 = vpack.c.bf16 %v50, %v44
    %v141 = vpack.c.bf16 %v57, %v51
    %v142 = vpack.c.bf16 %v58, %v52
    %v143 = vpack.c.bf16 %v59, %v53
    %v144 = vpack.c.bf16 %v60, %v54
    %v145 = vpack.c.bf16 %v61, %v55
    %v146 = vpack.c.bf16 %v62, %v56
    %v147 = vpack.c.bf16 %v69, %v63
    %v148 = vpack.c.bf16 %v70, %v64
    %v149 = vpack.c.bf16 %v71, %v65
    %v150 = vpack.c.bf16 %v72, %v66
    %v151 = vpack.c.bf16 %v73, %v67
    %v152 = vpack.c.bf16 %v74, %v68
    %v153 = vpack.c.bf16 %v81, %v75
    %v154 = vpack.c.bf16 %v82, %v76
    %v155 = vpack.c.bf16 %v83, %v77
    %v156 = vpack.c.bf16 %v84, %v78
    %v157 = vpack.c.bf16 %v85, %v79
    %v158 = vpack.c.bf16 %v86, %v80
    %v159 = vpack.c.bf16 %v93, %v87
    %v160 = vpack.c.bf16 %v94, %v88
    %v161 = vpack.c.bf16 %v95, %v89
    %v162 = vpack.c.bf16 %v96, %v90
    %v163 = vpack.c.bf16 %v97, %v91
    %v164 = vpack.c.bf16 %v98, %v92
    %v165 = vpack.c.bf16 %v105, %v99
    %v166 = vpack.c.bf16 %v106, %v100
    %v167 = vpack.c.bf16 %v107, %v101
    %v168 = vpack.c.bf16 %v108, %v102
    %v169 = vpack.c.bf16 %v109, %v103
    %v170 = vpack.c.bf16 %v110, %v104
    %v171 = vpack.c.bf16 %v117, %v111
    %v172 = vpack.c.bf16 %v118, %v112
    %v173 = vpack.c.bf16 %v119, %v113
    %v174 = vpack.c.bf16 %v120, %v114
    %v175 = vpack.c.bf16 %v121, %v115
    %v176 = vpack.c.bf16 %v122, %v116
    %v177 = vpack.c.bf16 %v129, %v123
    %v178 = vpack.c.bf16 %v130, %v124
    %v179 = vpack.c.bf16 %v131, %v125
    %v180 = vpack.c.bf16 %v132, %v126
    %v181 = vpack.c.bf16 %v133, %v127
    %v182 = vpack.c.bf16 %v134, %v128
    %v183 = vld [vmem:[%s1] sm:$0xf]
    %v184 = vld [vmem:[%s1 + $0x4] sm:$0xf]
    %v187 = vunpack.c.l.b16 %v183
    %v188 = vunpack.c.l.b16 %v184
    %v189 = vpack.c.b16 %v188, %v187
    %191 = vmatprep.subr.bf16.mxu0 %v136
    %192 = vmatpush1.bf16.msra.mxu0 %v135
    %193 = vmatprep.subr.bf16.mxu0 %v142
    %194 = vmatpush1.bf16.msra.mxu0 %v141
    %195 = vmatprep.subr.bf16.mxu0 %v148
    %196 = vmatpush1.bf16.msra.mxu0 %v147
    %197 = vmatprep.subr.bf16.mxu0 %v154
    %198 = vmatpush1.bf16.msra.mxu0 %v153
    %199 = vmatprep.subr.bf16.mxu0 %v160
    %200 = vmatpush1.bf16.msra.mxu0 %v159
    %201 = vmatprep.subr.bf16.mxu0 %v166
    %202 = vmatpush1.bf16.msra.mxu0 %v165
    %203 = vmatprep.subr.bf16.mxu0 %v172
    %204 = vmatpush1.bf16.msra.mxu0 %v171
    %205 = vmatprep.subr.bf16.mxu0 %v178
    %206 = vmatpush1.bf16.msra.mxu0 %v177
    %207 = vmatprep.subr.bf16.mxu0 0
    %208 = vmatpush1.bf16.msra.mxu0 0
    %209 = vmatprep.subr.bf16.mxu0 0
    %210 = vmatpush1.bf16.msra.mxu0 0
    %211 = vmatprep.subr.bf16.mxu0 0
    %212 = vmatpush1.bf16.msra.mxu0 0
    %213 = vmatprep.subr.bf16.mxu0 0
    %214 = vmatpush1.bf16.msra.mxu0 0
    %215 = vmatprep.subr.bf16.mxu0 0
    %216 = vmatpush1.bf16.msra.mxu0 0
    %217 = vmatprep.subr.bf16.mxu0 0
    %218 = vmatpush1.bf16.msra.mxu0 0
    %219 = vmatprep.subr.bf16.mxu0 0
    %220 = vmatpush1.bf16.msra.mxu0 0
    %221 = vmatprep.subr.bf16.mxu0 0
    %222 = vmatpush1.bf16.msra.mxu0 0
    %223 = vmatprep.mubr.bf16.mxu0 0
    %224 = vmatmul.mubr.bf16.gmra.mrb[0].mxu0 %v189
    %v225 = vpop.f32.mrb[0].mxu0
    %v226 = vadd.f32 0.0, %v225
    %v227 = vpop.f32.mrb[0].mxu0
    %v228 = vadd.f32 0.0, %v227
    %v229 = vpop.f32.mrb[0].mxu0
    %v230 = vadd.f32 0.0, %v229
    %v231 = vpop.f32.mrb[0].mxu0
    %v232 = vadd.f32 0.0, %v231
    %233 = vdwg.mxu0
    %234 = vmatprep.subr.bf16.mxu0 %v138
    %235 = vmatpush1.bf16.msra.mxu0 %v137
    %236 = vmatprep.subr.bf16.mxu0 %v144
    %237 = vmatpush1.bf16.msra.mxu0 %v143
    %238 = vmatprep.subr.bf16.mxu0 %v150
    %239 = vmatpush1.bf16.msra.mxu0 %v149
    %240 = vmatprep.subr.bf16.mxu0 %v156
    %241 = vmatpush1.bf16.msra.mxu0 %v155
    %242 = vmatprep.subr.bf16.mxu0 %v162
    %243 = vmatpush1.bf16.msra.mxu0 %v161
    %244 = vmatprep.subr.bf16.mxu0 %v168
    %245 = vmatpush1.bf16.msra.mxu0 %v167
    %246 = vmatprep.subr.bf16.mxu0 %v174
    %247 = vmatpush1.bf16.msra.mxu0 %v173
    %248 = vmatprep.subr.bf16.mxu0 %v180
    %249 = vmatpush1.bf16.msra.mxu0 %v179
    %250 = vmatprep.subr.bf16.mxu0 0
    %251 = vmatpush1.bf16.msra.mxu0 0
    %252 = vmatprep.subr.bf16.mxu0 0
    %253 = vmatpush1.bf16.msra.mxu0 0
    %254 = vmatprep.subr.bf16.mxu0 0
    %255 = vmatpush1.bf16.msra.mxu0 0
    %256 = vmatprep.subr.bf16.mxu0 0
    %257 = vmatpush1.bf16.msra.mxu0 0
    %258 = vmatprep.subr.bf16.mxu0 0
    %259 = vmatpush1.bf16.msra.mxu0 0
    %260 = vmatprep.subr.bf16.mxu0 0
    %261 = vmatpush1.bf16.msra.mxu0 0
    %262 = vmatprep.subr.bf16.mxu0 0
    %263 = vmatpush1.bf16.msra.mxu0 0
    %264 = vmatprep.subr.bf16.mxu0 0
    %265 = vmatpush1.bf16.msra.mxu0 0
    %266 = vmatprep.mubr.bf16.mxu0 0
    %267 = vmatmul.mubr.bf16.gmra.mrb[0].mxu0 %v189
    %v268 = vpop.f32.mrb[0].mxu0
    %v269 = vadd.f32 0.0, %v268
    %v270 = vpop.f32.mrb[0].mxu0
    %v271 = vadd.f32 0.0, %v270
    %v272 = vpop.f32.mrb[0].mxu0
    %v273 = vadd.f32 0.0, %v272
    %v274 = vpop.f32.mrb[0].mxu0
    %v275 = vadd.f32 0.0, %v274
    %276 = vdwg.mxu0
    %277 = vmatprep.subr.bf16.mxu0 %v140
    %278 = vmatpush1.bf16.msra.mxu0 %v139
    %279 = vmatprep.subr.bf16.mxu0 %v146
    %280 = vmatpush1.bf16.msra.mxu0 %v145
    %281 = vmatprep.subr.bf16.mxu0 %v152
    %282 = vmatpush1.bf16.msra.mxu0 %v151
    %283 = vmatprep.subr.bf16.mxu0 %v158
    %284 = vmatpush1.bf16.msra.mxu0 %v157
    %285 = vmatprep.subr.bf16.mxu0 %v164
    %286 = vmatpush1.bf16.msra.mxu0 %v163
    %287 = vmatprep.subr.bf16.mxu0 %v170
    %288 = vmatpush1.bf16.msra.mxu0 %v169
    %289 = vmatprep.subr.bf16.mxu0 %v176
    %290 = vmatpush1.bf16.msra.mxu0 %v175
    %291 = vmatprep.subr.bf16.mxu0 %v182
    %292 = vmatpush1.bf16.msra.mxu0 %v181
    %293 = vmatprep.subr.bf16.mxu0 0
    %294 = vmatpush1.bf16.msra.mxu0 0
    %295 = vmatprep.subr.bf16.mxu0 0
    %296 = vmatpush1.bf16.msra.mxu0 0
    %297 = vmatprep.subr.bf16.mxu0 0
    %298 = vmatpush1.bf16.msra.mxu0 0
    %299 = vmatprep.subr.bf16.mxu0 0
    %300 = vmatpush1.bf16.msra.mxu0 0
    %301 = vmatprep.subr.bf16.mxu0 0
    %302 = vmatpush1.bf16.msra.mxu0 0
    %303 = vmatprep.subr.bf16.mxu0 0
    %304 = vmatpush1.bf16.msra.mxu0 0
    %305 = vmatprep.subr.bf16.mxu0 0
    %306 = vmatpush1.bf16.msra.mxu0 0
    %307 = vmatprep.subr.bf16.mxu0 0
    %308 = vmatpush1.bf16.msra.mxu0 0
    %309 = vmatprep.mubr.bf16.mxu0 0
    %310 = vmatmul.mubr.bf16.gmra.mrb[0].mxu0 %v189
    %v311 = vpop.f32.mrb[0].mxu0
    %v312 = vadd.f32 0.0, %v311
    %v313 = vpop.f32.mrb[0].mxu0
    %v314 = vadd.f32 0.0, %v313
    %v315 = vpop.f32.mrb[0].mxu0
    %v316 = vadd.f32 0.0, %v315
    %v317 = vpop.f32.mrb[0].mxu0
    %v318 = vadd.f32 0.0, %v317
    %319 = vdwg.mxu0
    %v320 = vpack.c.bf16 %v230, %v226
    %v321 = vpack.c.bf16 %v232, %v228
    %v322 = vpack.c.bf16 %v273, %v269
    %v323 = vpack.c.bf16 %v275, %v271
    %v324 = vpack.c.bf16 %v316, %v312
    %v325 = vpack.c.bf16 %v318, %v314
    %v326 = vld [vmem:[%s2] sm:$0xf]
    %v327 = vld [vmem:[%s2 + $0x4] sm:$0xf]
    %v328 = vld [vmem:[%s2 + $0x8] sm:$0xf]
    %v329 = vld [vmem:[%s2 + $0xc] sm:$0xf]
    %v330 = vld [vmem:[%s2 + $0x10] sm:$0xf]
    %v331 = vld [vmem:[%s2 + $0x14] sm:$0xf]
    %v332 = vld [vmem:[%s2 + $0x18] sm:$0xf]
    %v333 = vld [vmem:[%s2 + $0x1c] sm:$0xf]
    %v334 = vld [vmem:[%s2 + $0x20] sm:$0xf]
    %v335 = vld [vmem:[%s2 + $0x24] sm:$0xf]
    %v336 = vld [vmem:[%s2 + $0x28] sm:$0xf]
    %v337 = vld [vmem:[%s2 + $0x2c] sm:$0xf]
    %v338 = vld [vmem:[%s2 + $0x30] sm:$0xf]
    %v339 = vld [vmem:[%s2 + $0x34] sm:$0xf]
    %v340 = vld [vmem:[%s2 + $0x38] sm:$0xf]
    %v341 = vld [vmem:[%s2 + $0x3c] sm:$0xf]
    %v342 = vld [vmem:[%s2 + $0x40] sm:$0xf]
    %v343 = vld [vmem:[%s2 + $0x44] sm:$0xf]
    %v344 = vld [vmem:[%s2 + $0x48] sm:$0xf]
    %v345 = vld [vmem:[%s2 + $0x4c] sm:$0xf]
    %v346 = vld [vmem:[%s2 + $0x50] sm:$0xf]
    %v347 = vld [vmem:[%s2 + $0x54] sm:$0xf]
    %v348 = vld [vmem:[%s2 + $0x58] sm:$0xf]
    %v349 = vld [vmem:[%s2 + $0x5c] sm:$0xf]
    %v350 = vld [vmem:[%s2 + $0x60] sm:$0xf]
    %v351 = vld [vmem:[%s2 + $0x64] sm:$0xf]
    %v352 = vld [vmem:[%s2 + $0x68] sm:$0xf]
    %v353 = vld [vmem:[%s2 + $0x6c] sm:$0xf]
    %v354 = vld [vmem:[%s2 + $0x70] sm:$0xf]
    %v355 = vld [vmem:[%s2 + $0x74] sm:$0xf]
    %v356 = vld [vmem:[%s2 + $0x78] sm:$0xf]
    %v357 = vld [vmem:[%s2 + $0x7c] sm:$0xf]
    %v358 = vld [vmem:[%s2 + $0x80] sm:$0xf]
    %v359 = vld [vmem:[%s2 + $0x84] sm:$0xf]
    %v360 = vld [vmem:[%s2 + $0x88] sm:$0xf]
    %v361 = vld [vmem:[%s2 + $0x8c] sm:$0xf]
    %v362 = vld [vmem:[%s2 + $0x90] sm:$0xf]
    %v363 = vld [vmem:[%s2 + $0x94] sm:$0xf]
    %v364 = vld [vmem:[%s2 + $0x98] sm:$0xf]
    %v365 = vld [vmem:[%s2 + $0x9c] sm:$0xf]
    %v366 = vld [vmem:[%s2 + $0xa0] sm:$0xf]
    %v367 = vld [vmem:[%s2 + $0xa4] sm:$0xf]
    %v368 = vld [vmem:[%s2 + $0xa8] sm:$0xf]
    %v369 = vld [vmem:[%s2 + $0xac] sm:$0xf]
    %v370 = vld [vmem:[%s2 + $0xb0] sm:$0xf]
    %v371 = vld [vmem:[%s2 + $0xb4] sm:$0xf]
    %v372 = vld [vmem:[%s2 + $0xb8] sm:$0xf]
    %v373 = vld [vmem:[%s2 + $0xbc] sm:$0xf]
    %v374 = vld [vmem:[%s2 + $0xc0] sm:$0xf]
    %v375 = vld [vmem:[%s2 + $0xc4] sm:$0xf]
    %v376 = vld [vmem:[%s2 + $0xc8] sm:$0xf]
    %v377 = vld [vmem:[%s2 + $0xcc] sm:$0xf]
    %v378 = vld [vmem:[%s2 + $0xd0] sm:$0xf]
    %v379 = vld [vmem:[%s2 + $0xd4] sm:$0xf]
    %v380 = vld [vmem:[%s2 + $0xd8] sm:$0xf]
    %v381 = vld [vmem:[%s2 + $0xdc] sm:$0xf]
    %v382 = vld [vmem:[%s2 + $0xe0] sm:$0xf]
    %v383 = vld [vmem:[%s2 + $0xe4] sm:$0xf]
    %v384 = vld [vmem:[%s2 + $0xe8] sm:$0xf]
    %v385 = vld [vmem:[%s2 + $0xec] sm:$0xf]
    %v386 = vld [vmem:[%s2 + $0xf0] sm:$0xf]
    %v387 = vld [vmem:[%s2 + $0xf4] sm:$0xf]
    %v388 = vld [vmem:[%s2 + $0xf8] sm:$0xf]
    %v389 = vld [vmem:[%s2 + $0xfc] sm:$0xf]
    %v390 = vld [vmem:[%s2 + $0x100] sm:$0xf]
    %v391 = vld [vmem:[%s2 + $0x104] sm:$0xf]
    %v392 = vld [vmem:[%s2 + $0x108] sm:$0xf]
    %v393 = vld [vmem:[%s2 + $0x10c] sm:$0xf]
    %v394 = vld [vmem:[%s2 + $0x110] sm:$0xf]
    %v395 = vld [vmem:[%s2 + $0x114] sm:$0xf]
    %v396 = vld [vmem:[%s2 + $0x118] sm:$0xf]
    %v397 = vld [vmem:[%s2 + $0x11c] sm:$0xf]
    %v398 = vld [vmem:[%s2 + $0x120] sm:$0xf]
    %v399 = vld [vmem:[%s2 + $0x124] sm:$0xf]
    %v400 = vld [vmem:[%s2 + $0x128] sm:$0xf]
    %v401 = vld [vmem:[%s2 + $0x12c] sm:$0xf]
    %v402 = vld [vmem:[%s2 + $0x130] sm:$0xf]
    %v403 = vld [vmem:[%s2 + $0x134] sm:$0xf]
    %v404 = vld [vmem:[%s2 + $0x138] sm:$0xf]
    %v405 = vld [vmem:[%s2 + $0x13c] sm:$0xf]
    %v406 = vld [vmem:[%s2 + $0x140] sm:$0xf]
    %v407 = vld [vmem:[%s2 + $0x144] sm:$0xf]
    %v408 = vld [vmem:[%s2 + $0x148] sm:$0xf]
    %v409 = vld [vmem:[%s2 + $0x14c] sm:$0xf]
    %v410 = vld [vmem:[%s2 + $0x150] sm:$0xf]
    %v411 = vld [vmem:[%s2 + $0x154] sm:$0xf]
    %v412 = vld [vmem:[%s2 + $0x158] sm:$0xf]
    %v413 = vld [vmem:[%s2 + $0x15c] sm:$0xf]
    %v414 = vld [vmem:[%s2 + $0x160] sm:$0xf]
    %v415 = vld [vmem:[%s2 + $0x164] sm:$0xf]
    %v416 = vld [vmem:[%s2 + $0x168] sm:$0xf]
    %v417 = vld [vmem:[%s2 + $0x16c] sm:$0xf]
    %v418 = vld [vmem:[%s2 + $0x170] sm:$0xf]
    %v419 = vld [vmem:[%s2 + $0x174] sm:$0xf]
    %v420 = vld [vmem:[%s2 + $0x178] sm:$0xf]
    %v421 = vld [vmem:[%s2 + $0x17c] sm:$0xf]
    %v422 = vld [vmem:[%s3] sm:$0x1]
    %v424 = vlaneseq
    %v425 = vshrl.u32 %v424, 7
    %v426 = vsub.s32 0, %v425
    %v427 = vrot.slane %v422, %v426
    %v525 = vunpack.c.l.b16 %v326
    %v526 = vunpack.c.l.b16 %v327
    %v527 = vunpack.c.l.b16 %v328
    %v528 = vunpack.c.l.b16 %v329
    %v529 = vunpack.c.l.b16 %v330
    %v530 = vunpack.c.l.b16 %v331
    %v531 = vunpack.c.l.b16 %v332
    %v532 = vunpack.c.l.b16 %v333
    %v533 = vunpack.c.l.b16 %v334
    %v534 = vunpack.c.l.b16 %v335
    %v535 = vunpack.c.l.b16 %v336
    %v536 = vunpack.c.l.b16 %v337
    %v537 = vunpack.c.l.b16 %v338
    %v538 = vunpack.c.l.b16 %v339
    %v539 = vunpack.c.l.b16 %v340
    %v540 = vunpack.c.l.b16 %v341
    %v541 = vunpack.c.l.b16 %v342
    %v542 = vunpack.c.l.b16 %v343
    %v543 = vunpack.c.l.b16 %v344
    %v544 = vunpack.c.l.b16 %v345
    %v545 = vunpack.c.l.b16 %v346
    %v546 = vunpack.c.l.b16 %v347
    %v547 = vunpack.c.l.b16 %v348
    %v548 = vunpack.c.l.b16 %v349
    %v549 = vunpack.c.l.b16 %v350
    %v550 = vunpack.c.l.b16 %v351
    %v551 = vunpack.c.l.b16 %v352
    %v552 = vunpack.c.l.b16 %v353
    %v553 = vunpack.c.l.b16 %v354
    %v554 = vunpack.c.l.b16 %v355
    %v555 = vunpack.c.l.b16 %v356
    %v556 = vunpack.c.l.b16 %v357
    %v557 = vunpack.c.l.b16 %v358
    %v558 = vunpack.c.l.b16 %v359
    %v559 = vunpack.c.l.b16 %v360
    %v560 = vunpack.c.l.b16 %v361
    %v561 = vunpack.c.l.b16 %v362
    %v562 = vunpack.c.l.b16 %v363
    %v563 = vunpack.c.l.b16 %v364
    %v564 = vunpack.c.l.b16 %v365
    %v565 = vunpack.c.l.b16 %v366
    %v566 = vunpack.c.l.b16 %v367
    %v567 = vunpack.c.l.b16 %v368
    %v568 = vunpack.c.l.b16 %v369
    %v569 = vunpack.c.l.b16 %v370
    %v570 = vunpack.c.l.b16 %v371
    %v571 = vunpack.c.l.b16 %v372
    %v572 = vunpack.c.l.b16 %v373
    %v573 = vunpack.c.l.b16 %v374
    %v574 = vunpack.c.l.b16 %v375
    %v575 = vunpack.c.l.b16 %v376
    %v576 = vunpack.c.l.b16 %v377
    %v577 = vunpack.c.l.b16 %v378
    %v578 = vunpack.c.l.b16 %v379
    %v579 = vunpack.c.l.b16 %v380
    %v580 = vunpack.c.l.b16 %v381
    %v581 = vunpack.c.l.b16 %v382
    %v582 = vunpack.c.l.b16 %v383
    %v583 = vunpack.c.l.b16 %v384
    %v584 = vunpack.c.l.b16 %v385
    %v585 = vunpack.c.l.b16 %v386
    %v586 = vunpack.c.l.b16 %v387
    %v587 = vunpack.c.l.b16 %v388
    %v588 = vunpack.c.l.b16 %v389
    %v589 = vunpack.c.l.b16 %v390
    %v590 = vunpack.c.l.b16 %v391
    %v591 = vunpack.c.l.b16 %v392
    %v592 = vunpack.c.l.b16 %v393
    %v593 = vunpack.c.l.b16 %v394
    %v594 = vunpack.c.l.b16 %v395
    %v595 = vunpack.c.l.b16 %v396
    %v596 = vunpack.c.l.b16 %v397
    %v597 = vunpack.c.l.b16 %v398
    %v598 = vunpack.c.l.b16 %v399
    %v599 = vunpack.c.l.b16 %v400
    %v600 = vunpack.c.l.b16 %v401
    %v601 = vunpack.c.l.b16 %v402
    %v602 = vunpack.c.l.b16 %v403
    %v603 = vunpack.c.l.b16 %v404
    %v604 = vunpack.c.l.b16 %v405
    %v605 = vunpack.c.l.b16 %v406
    %v606 = vunpack.c.l.b16 %v407
    %v607 = vunpack.c.l.b16 %v408
    %v608 = vunpack.c.l.b16 %v409
    %v609 = vunpack.c.l.b16 %v410
    %v610 = vunpack.c.l.b16 %v411
    %v611 = vunpack.c.l.b16 %v412
    %v612 = vunpack.c.l.b16 %v413
    %v613 = vunpack.c.l.b16 %v414
    %v614 = vunpack.c.l.b16 %v415
    %v615 = vunpack.c.l.b16 %v416
    %v616 = vunpack.c.l.b16 %v417
    %v617 = vunpack.c.l.b16 %v418
    %v618 = vunpack.c.l.b16 %v419
    %v619 = vunpack.c.l.b16 %v420
    %v620 = vunpack.c.l.b16 %v421
    %v621 = vpack.c.b16 %v526, %v525
    %v622 = vpack.c.b16 %v528, %v527
    %v623 = vpack.c.b16 %v530, %v529
    %v624 = vpack.c.b16 %v532, %v531
    %v625 = vpack.c.b16 %v534, %v533
    %v626 = vpack.c.b16 %v536, %v535
    %v627 = vpack.c.b16 %v538, %v537
    %v628 = vpack.c.b16 %v540, %v539
    %v629 = vpack.c.b16 %v542, %v541
    %v630 = vpack.c.b16 %v544, %v543
    %v631 = vpack.c.b16 %v546, %v545
    %v632 = vpack.c.b16 %v548, %v547
    %v633 = vpack.c.b16 %v550, %v549
    %v634 = vpack.c.b16 %v552, %v551
    %v635 = vpack.c.b16 %v554, %v553
    %v636 = vpack.c.b16 %v556, %v555
    %v637 = vpack.c.b16 %v558, %v557
    %v638 = vpack.c.b16 %v560, %v559
    %v639 = vpack.c.b16 %v562, %v561
    %v640 = vpack.c.b16 %v564, %v563
    %v641 = vpack.c.b16 %v566, %v565
    %v642 = vpack.c.b16 %v568, %v567
    %v643 = vpack.c.b16 %v570, %v569
    %v644 = vpack.c.b16 %v572, %v571
    %v645 = vpack.c.b16 %v574, %v573
    %v646 = vpack.c.b16 %v576, %v575
    %v647 = vpack.c.b16 %v578, %v577
    %v648 = vpack.c.b16 %v580, %v579
    %v649 = vpack.c.b16 %v582, %v581
    %v650 = vpack.c.b16 %v584, %v583
    %v651 = vpack.c.b16 %v586, %v585
    %v652 = vpack.c.b16 %v588, %v587
    %v653 = vpack.c.b16 %v590, %v589
    %v654 = vpack.c.b16 %v592, %v591
    %v655 = vpack.c.b16 %v594, %v593
    %v656 = vpack.c.b16 %v596, %v595
    %v657 = vpack.c.b16 %v598, %v597
    %v658 = vpack.c.b16 %v600, %v599
    %v659 = vpack.c.b16 %v602, %v601
    %v660 = vpack.c.b16 %v604, %v603
    %v661 = vpack.c.b16 %v606, %v605
    %v662 = vpack.c.b16 %v608, %v607
    %v663 = vpack.c.b16 %v610, %v609
    %v664 = vpack.c.b16 %v612, %v611
    %v665 = vpack.c.b16 %v614, %v613
    %v666 = vpack.c.b16 %v616, %v615
    %v667 = vpack.c.b16 %v618, %v617
    %v668 = vpack.c.b16 %v620, %v619
    %717 = vmatprep.subr.bf16.mxu0 0
    %718 = vmatpush1.bf16.msra.mxu0 %v621
    %719 = vmatprep.subr.bf16.mxu0 0
    %720 = vmatpush1.bf16.msra.mxu0 %v622
    %721 = vmatprep.subr.bf16.mxu0 0
    %722 = vmatpush1.bf16.msra.mxu0 %v623
    %723 = vmatprep.subr.bf16.mxu0 0
    %724 = vmatpush1.bf16.msra.mxu0 %v624
    %725 = vmatprep.subr.bf16.mxu0 0
    %726 = vmatpush1.bf16.msra.mxu0 %v625
    %727 = vmatprep.subr.bf16.mxu0 0
    %728 = vmatpush1.bf16.msra.mxu0 %v626
    %729 = vmatprep.subr.bf16.mxu0 0
    %730 = vmatpush1.bf16.msra.mxu0 %v627
    %731 = vmatprep.subr.bf16.mxu0 0
    %732 = vmatpush1.bf16.msra.mxu0 %v628
    %733 = vmatprep.subr.bf16.mxu0 0
    %734 = vmatpush1.bf16.msra.mxu0 %v629
    %735 = vmatprep.subr.bf16.mxu0 0
    %736 = vmatpush1.bf16.msra.mxu0 %v630
    %737 = vmatprep.subr.bf16.mxu0 0
    %738 = vmatpush1.bf16.msra.mxu0 %v631
    %739 = vmatprep.subr.bf16.mxu0 0
    %740 = vmatpush1.bf16.msra.mxu0 %v632
    %741 = vmatprep.subr.bf16.mxu0 0
    %742 = vmatpush1.bf16.msra.mxu0 %v633
    %743 = vmatprep.subr.bf16.mxu0 0
    %744 = vmatpush1.bf16.msra.mxu0 %v634
    %745 = vmatprep.subr.bf16.mxu0 0
    %746 = vmatpush1.bf16.msra.mxu0 %v635
    %747 = vmatprep.subr.bf16.mxu0 0
    %748 = vmatpush1.bf16.msra.mxu0 %v636
    %749 = vmatprep.mubr.bf16.mxu0 %v321
    %750 = vmatmul.mubr.bf16.gmra.mrb[0].mxu0 %v320
    %v751 = vpop.f32.mrb[0].mxu0
    %v752 = vadd.f32 %v427, %v751
    %v753 = vpop.f32.mrb[0].mxu0
    %v754 = vpop.f32.mrb[0].mxu0
    %v755 = vadd.f32 %v427, %v754
    %v756 = vpop.f32.mrb[0].mxu0
    %757 = vdwg.mxu0
    %758 = vmatprep.subr.bf16.mxu0 0
    %759 = vmatpush1.bf16.msra.mxu0 %v637
    %760 = vmatprep.subr.bf16.mxu0 0
    %761 = vmatpush1.bf16.msra.mxu0 %v638
    %762 = vmatprep.subr.bf16.mxu0 0
    %763 = vmatpush1.bf16.msra.mxu0 %v639
    %764 = vmatprep.subr.bf16.mxu0 0
    %765 = vmatpush1.bf16.msra.mxu0 %v640
    %766 = vmatprep.subr.bf16.mxu0 0
    %767 = vmatpush1.bf16.msra.mxu0 %v641
    %768 = vmatprep.subr.bf16.mxu0 0
    %769 = vmatpush1.bf16.msra.mxu0 %v642
    %770 = vmatprep.subr.bf16.mxu0 0
    %771 = vmatpush1.bf16.msra.mxu0 %v643
    %772 = vmatprep.subr.bf16.mxu0 0
    %773 = vmatpush1.bf16.msra.mxu0 %v644
    %774 = vmatprep.subr.bf16.mxu0 0
    %775 = vmatpush1.bf16.msra.mxu0 %v645
    %776 = vmatprep.subr.bf16.mxu0 0
    %777 = vmatpush1.bf16.msra.mxu0 %v646
    %778 = vmatprep.subr.bf16.mxu0 0
    %779 = vmatpush1.bf16.msra.mxu0 %v647
    %780 = vmatprep.subr.bf16.mxu0 0
    %781 = vmatpush1.bf16.msra.mxu0 %v648
    %782 = vmatprep.subr.bf16.mxu0 0
    %783 = vmatpush1.bf16.msra.mxu0 %v649
    %784 = vmatprep.subr.bf16.mxu0 0
    %785 = vmatpush1.bf16.msra.mxu0 %v650
    %786 = vmatprep.subr.bf16.mxu0 0
    %787 = vmatpush1.bf16.msra.mxu0 %v651
    %788 = vmatprep.subr.bf16.mxu0 0
    %789 = vmatpush1.bf16.msra.mxu0 %v652
    %790 = vmatprep.mubr.bf16.mxu0 %v323
    %791 = vmatmul.mubr.bf16.gmra.mrb[0].mxu0 %v322
    %v792 = vpop.f32.mrb[0].mxu0
    %v793 = vadd.f32 %v752, %v792
    %v794 = vpop.f32.mrb[0].mxu0
    %v795 = vpop.f32.mrb[0].mxu0
    %v796 = vadd.f32 %v755, %v795
    %v797 = vpop.f32.mrb[0].mxu0
    %798 = vdwg.mxu0
    %799 = vmatprep.subr.bf16.mxu0 0
    %800 = vmatpush1.bf16.msra.mxu0 %v653
    %801 = vmatprep.subr.bf16.mxu0 0
    %802 = vmatpush1.bf16.msra.mxu0 %v654
    %803 = vmatprep.subr.bf16.mxu0 0
    %804 = vmatpush1.bf16.msra.mxu0 %v655
    %805 = vmatprep.subr.bf16.mxu0 0
    %806 = vmatpush1.bf16.msra.mxu0 %v656
    %807 = vmatprep.subr.bf16.mxu0 0
    %808 = vmatpush1.bf16.msra.mxu0 %v657
    %809 = vmatprep.subr.bf16.mxu0 0
    %810 = vmatpush1.bf16.msra.mxu0 %v658
    %811 = vmatprep.subr.bf16.mxu0 0
    %812 = vmatpush1.bf16.msra.mxu0 %v659
    %813 = vmatprep.subr.bf16.mxu0 0
    %814 = vmatpush1.bf16.msra.mxu0 %v660
    %815 = vmatprep.subr.bf16.mxu0 0
    %816 = vmatpush1.bf16.msra.mxu0 %v661
    %817 = vmatprep.subr.bf16.mxu0 0
    %818 = vmatpush1.bf16.msra.mxu0 %v662
    %819 = vmatprep.subr.bf16.mxu0 0
    %820 = vmatpush1.bf16.msra.mxu0 %v663
    %821 = vmatprep.subr.bf16.mxu0 0
    %822 = vmatpush1.bf16.msra.mxu0 %v664
    %823 = vmatprep.subr.bf16.mxu0 0
    %824 = vmatpush1.bf16.msra.mxu0 %v665
    %825 = vmatprep.subr.bf16.mxu0 0
    %826 = vmatpush1.bf16.msra.mxu0 %v666
    %827 = vmatprep.subr.bf16.mxu0 0
    %828 = vmatpush1.bf16.msra.mxu0 %v667
    %829 = vmatprep.subr.bf16.mxu0 0
    %830 = vmatpush1.bf16.msra.mxu0 %v668
    %831 = vmatprep.mubr.bf16.mxu0 %v325
    %832 = vmatmul.mubr.bf16.gmra.mrb[0].mxu0 %v324
    %v833 = vpop.f32.mrb[0].mxu0
    %v834 = vadd.f32 %v793, %v833
    %v835 = vpop.f32.mrb[0].mxu0
    %v836 = vpop.f32.mrb[0].mxu0
    %v837 = vadd.f32 %v796, %v836
    %v838 = vpop.f32.mrb[0].mxu0
    %839 = vdwg.mxu0
    %v840 = vld [vmem:[%s4] sm:$0xff]
    %v841 = vld [vmem:[%s5] sm:$0x1]
    %vm842 = vcmask 130048
    %v844 = vsel %vm842, %v840, 0
    %v847 = vsel %vm842, %v834, 0
    %v850 = vsel %vm842, %v837, 0
    %852 = vmatprep.subr.mxu0 0.0
    %853 = vmatpush1.xpose.msra.mxu0 %v847
    %854 = vmatprep.subr.mxu0 0.0
    %855 = vmatpush1.xpose.msra.mxu0 %v850
    %856 = vmatprep.subr.mxu0 0.0
    %857 = vmatpush1.xpose.msra.mxu0 0.0
    %858 = vmatprep.subr.mxu0 0.0
    %859 = vmatpush1.xpose.msra.mxu0 0.0
    %860 = vmatprep.subr.mxu0 0.0
    %861 = vmatpush1.xpose.msra.mxu0 0.0
    %862 = vmatprep.subr.mxu0 0.0
    %863 = vmatpush1.xpose.msra.mxu0 0.0
    %864 = vmatprep.subr.mxu0 0.0
    %865 = vmatpush1.xpose.msra.mxu0 0.0
    %866 = vmatprep.subr.mxu0 0.0
    %867 = vmatpush1.xpose.msra.mxu0 0.0
    %868 = vmatprep.subr.mxu0 0.0
    %869 = vmatpush1.xpose.msra.mxu0 0.0
    %870 = vmatprep.subr.mxu0 0.0
    %871 = vmatpush1.xpose.msra.mxu0 0.0
    %872 = vmatprep.subr.mxu0 0.0
    %873 = vmatpush1.xpose.msra.mxu0 0.0
    %874 = vmatprep.subr.mxu0 0.0
    %875 = vmatpush1.xpose.msra.mxu0 0.0
    %876 = vmatprep.subr.mxu0 0.0
    %877 = vmatpush1.xpose.msra.mxu0 0.0
    %878 = vmatprep.subr.mxu0 0.0
    %879 = vmatpush1.xpose.msra.mxu0 0.0
    %880 = vmatprep.subr.mxu0 0.0
    %881 = vmatpush1.xpose.msra.mxu0 0.0
    %882 = vmatprep.subr.mxu0 0.0
    %883 = vmatpush1.xpose.msra.mxu0 0.0
    %884 = vmatprep.subr.mxu0 0.0
    %885 = vmatpush1.xpose.msra.mxu0 0.0
    %886 = vmatprep.subr.mxu0 0.0
    %887 = vmatpush1.xpose.msra.mxu0 0.0
    %888 = vmatprep.subr.mxu0 0.0
    %889 = vmatpush1.xpose.msra.mxu0 0.0
    %890 = vmatprep.subr.mxu0 0.0
    %891 = vmatpush1.xpose.msra.mxu0 0.0
    %892 = vmatprep.subr.mxu0 0.0
    %893 = vmatpush1.xpose.msra.mxu0 0.0
    %894 = vmatprep.subr.mxu0 0.0
    %895 = vmatpush1.xpose.msra.mxu0 0.0
    %896 = vmatprep.subr.mxu0 0.0
    %897 = vmatpush1.xpose.msra.mxu0 0.0
    %898 = vmatprep.subr.mxu0 0.0
    %899 = vmatpush1.xpose.msra.mxu0 0.0
    %900 = vmatprep.subr.mxu0 0.0
    %901 = vmatpush1.xpose.msra.mxu0 0.0
    %902 = vmatprep.subr.mxu0 0.0
    %903 = vmatpush1.xpose.msra.mxu0 0.0
    %904 = vmatprep.subr.mxu0 0.0
    %905 = vmatpush1.xpose.msra.mxu0 0.0
    %906 = vmatprep.subr.mxu0 0.0
    %907 = vmatpush1.xpose.msra.mxu0 0.0
    %908 = vmatprep.subr.mxu0 0.0
    %909 = vmatpush1.xpose.msra.mxu0 0.0
    %910 = vmatprep.subr.mxu0 0.0
    %911 = vmatpush1.xpose.msra.mxu0 0.0
    %912 = vmatprep.subr.mxu0 0.0
    %913 = vmatpush1.xpose.msra.mxu0 0.0
    %914 = vmatprep.subr.mxu0 0.0
    %915 = vmatpush1.xpose.msra.mxu0 0.0
    %916 = vmatprep.mubr.f32.mxu0 0.0
    %917 = vmatmul.mubr.f32.gmra.mrb[0].mxu0 %v844
    %v918 = vpop.f32.mrb[0].mxu0
    %v919 = vadd.f32 0.0, %v918
    %v920 = vpop.f32.mrb[0].mxu0
    %921 = vdwg.mxu0
    %v922 = vmul.f32 %v919, 0.25
    %v923 = vsel %vm842, %v922, -inf
    %924 = vmax.xlane.f32.xlu0 %v923
    %v925 = vpop.xlane.xlu0 %924
    %v926 = vsub.f32 %v922, %v925
    %v927 = vmul.f32 %v926, 1.442695
    %v928 = vpow.pop %v927
    %v930 = vlaneseq
    %v931 = vshrl.u32 %v930, 7
    %v932 = vsub.s32 0, %v931
    %v933 = vrot.slane %v841, %v932
    %v935 = vmul.f32 %v928, %v933
    %v936 = vsel %vm842, %v935, 0.0
    %937 = vadd.xlane.f32.xlu0 %v936
    %v938 = vpop.xlane.xlu0 %937
    %v939 = vrcp.pop %v938
    %v940 = vmul.f32 %v935, %v939
    %941 = vrot.lane.b32.xlu0 %v834, 96
    %v942 = vpop.permute.xlu0 %941
    %943 = vrot.lane.b32.xlu0 %v837, 96
    %v944 = vpop.permute.xlu0 %943
    %v948 = vsel %vm842, %v940, 0
    %950 = vmatprep.subr.mxu0 0.0
    %951 = vmatpush1.msra.mxu0 %v942
    %952 = vmatprep.subr.mxu0 0.0
    %953 = vmatpush1.msra.mxu0 %v944
    %954 = vmatprep.subr.mxu0 0.0
    %955 = vmatpush1.msra.mxu0 0.0
    %956 = vmatprep.subr.mxu0 0.0
    %957 = vmatpush1.msra.mxu0 0.0
    %958 = vmatprep.subr.mxu0 0.0
    %959 = vmatpush1.msra.mxu0 0.0
    %960 = vmatprep.subr.mxu0 0.0
    %961 = vmatpush1.msra.mxu0 0.0
    %962 = vmatprep.subr.mxu0 0.0
    %963 = vmatpush1.msra.mxu0 0.0
    %964 = vmatprep.subr.mxu0 0.0
    %965 = vmatpush1.msra.mxu0 0.0
    %966 = vmatprep.subr.mxu0 0.0
    %967 = vmatpush1.msra.mxu0 0.0
    %968 = vmatprep.subr.mxu0 0.0
    %969 = vmatpush1.msra.mxu0 0.0
    %970 = vmatprep.subr.mxu0 0.0
    %971 = vmatpush1.msra.mxu0 0.0
    %972 = vmatprep.subr.mxu0 0.0
    %973 = vmatpush1.msra.mxu0 0.0
    %974 = vmatprep.subr.mxu0 0.0
    %975 = vmatpush1.msra.mxu0 0.0
    %976 = vmatprep.subr.mxu0 0.0
    %977 = vmatpush1.msra.mxu0 0.0
    %978 = vmatprep.subr.mxu0 0.0
    %979 = vmatpush1.msra.mxu0 0.0
    %980 = vmatprep.subr.mxu0 0.0
    %981 = vmatpush1.msra.mxu0 0.0
    %982 = vmatprep.subr.mxu0 0.0
    %983 = vmatpush1.msra.mxu0 0.0
    %984 = vmatprep.subr.mxu0 0.0
    %985 = vmatpush1.msra.mxu0 0.0
    %986 = vmatprep.subr.mxu0 0.0
    %987 = vmatpush1.msra.mxu0 0.0
    %988 = vmatprep.subr.mxu0 0.0
    %989 = vmatpush1.msra.mxu0 0.0
    %990 = vmatprep.subr.mxu0 0.0
    %991 = vmatpush1.msra.mxu0 0.0
    %992 = vmatprep.subr.mxu0 0.0
    %993 = vmatpush1.msra.mxu0 0.0
    %994 = vmatprep.subr.mxu0 0.0
    %995 = vmatpush1.msra.mxu0 0.0
    %996 = vmatprep.subr.mxu0 0.0
    %997 = vmatpush1.msra.mxu0 0.0
    %998 = vmatprep.subr.mxu0 0.0
    %999 = vmatpush1.msra.mxu0 0.0
    %1000 = vmatprep.subr.mxu0 0.0
    %1001 = vmatpush1.msra.mxu0 0.0
    %1002 = vmatprep.subr.mxu0 0.0
    %1003 = vmatpush1.msra.mxu0 0.0
    %1004 = vmatprep.subr.mxu0 0.0
    %1005 = vmatpush1.msra.mxu0 0.0
    %1006 = vmatprep.subr.mxu0 0.0
    %1007 = vmatpush1.msra.mxu0 0.0
    %1008 = vmatprep.subr.mxu0 0.0
    %1009 = vmatpush1.msra.mxu0 0.0
    %1010 = vmatprep.subr.mxu0 0.0
    %1011 = vmatpush1.msra.mxu0 0.0
    %1012 = vmatprep.subr.mxu0 0.0
    %1013 = vmatpush1.msra.mxu0 0.0
    %1014 = vmatprep.mubr.f32.mxu0 0.0
    %1015 = vmatmul.mubr.f32.gmra.mrb[0].mxu0 %v948
    %v1016 = vpop.f32.mrb[0].mxu0
    %v1017 = vadd.f32 0.0, %v1016
    %v1018 = vpop.f32.mrb[0].mxu0
    %1019 = vdwg.mxu0
    %1020 = vrot.lane.b32.xlu0 %v840, 112
    %v1021 = vpop.permute.xlu0 %1020
    %1022 = vrot.lane.b32.xlu0 %v834, 112
    %v1023 = vpop.permute.xlu0 %1022
    %1024 = vrot.lane.b32.xlu0 %v837, 112
    %v1025 = vpop.permute.xlu0 %1024
    %v1026 = vsel %vm842, %v1021, 0
    %v1028 = vsel %vm842, %v1023, 0
    %v1030 = vsel %vm842, %v1025, 0
    %1032 = vmatprep.subr.mxu0 0.0
    %1033 = vmatpush1.xpose.msra.mxu0 %v1028
    %1034 = vmatprep.subr.mxu0 0.0
    %1035 = vmatpush1.xpose.msra.mxu0 %v1030
    %1036 = vmatprep.subr.mxu0 0.0
    %1037 = vmatpush1.xpose.msra.mxu0 0.0
    %1038 = vmatprep.subr.mxu0 0.0
    %1039 = vmatpush1.xpose.msra.mxu0 0.0
    %1040 = vmatprep.subr.mxu0 0.0
    %1041 = vmatpush1.xpose.msra.mxu0 0.0
    %1042 = vmatprep.subr.mxu0 0.0
    %1043 = vmatpush1.xpose.msra.mxu0 0.0
    %1044 = vmatprep.subr.mxu0 0.0
    %1045 = vmatpush1.xpose.msra.mxu0 0.0
    %1046 = vmatprep.subr.mxu0 0.0
    %1047 = vmatpush1.xpose.msra.mxu0 0.0
    %1048 = vmatprep.subr.mxu0 0.0
    %1049 = vmatpush1.xpose.msra.mxu0 0.0
    %1050 = vmatprep.subr.mxu0 0.0
    %1051 = vmatpush1.xpose.msra.mxu0 0.0
    %1052 = vmatprep.subr.mxu0 0.0
    %1053 = vmatpush1.xpose.msra.mxu0 0.0
    %1054 = vmatprep.subr.mxu0 0.0
    %1055 = vmatpush1.xpose.msra.mxu0 0.0
    %1056 = vmatprep.subr.mxu0 0.0
    %1057 = vmatpush1.xpose.msra.mxu0 0.0
    %1058 = vmatprep.subr.mxu0 0.0
    %1059 = vmatpush1.xpose.msra.mxu0 0.0
    %1060 = vmatprep.subr.mxu0 0.0
    %1061 = vmatpush1.xpose.msra.mxu0 0.0
    %1062 = vmatprep.subr.mxu0 0.0
    %1063 = vmatpush1.xpose.msra.mxu0 0.0
    %1064 = vmatprep.subr.mxu0 0.0
    %1065 = vmatpush1.xpose.msra.mxu0 0.0
    %1066 = vmatprep.subr.mxu0 0.0
    %1067 = vmatpush1.xpose.msra.mxu0 0.0
    %1068 = vmatprep.subr.mxu0 0.0
    %1069 = vmatpush1.xpose.msra.mxu0 0.0
    %1070 = vmatprep.subr.mxu0 0.0
    %1071 = vmatpush1.xpose.msra.mxu0 0.0
    %1072 = vmatprep.subr.mxu0 0.0
    %1073 = vmatpush1.xpose.msra.mxu0 0.0
    %1074 = vmatprep.subr.mxu0 0.0
    %1075 = vmatpush1.xpose.msra.mxu0 0.0
    %1076 = vmatprep.subr.mxu0 0.0
    %1077 = vmatpush1.xpose.msra.mxu0 0.0
    %1078 = vmatprep.subr.mxu0 0.0
    %1079 = vmatpush1.xpose.msra.mxu0 0.0
    %1080 = vmatprep.subr.mxu0 0.0
    %1081 = vmatpush1.xpose.msra.mxu0 0.0
    %1082 = vmatprep.subr.mxu0 0.0
    %1083 = vmatpush1.xpose.msra.mxu0 0.0
    %1084 = vmatprep.subr.mxu0 0.0
    %1085 = vmatpush1.xpose.msra.mxu0 0.0
    %1086 = vmatprep.subr.mxu0 0.0
    %1087 = vmatpush1.xpose.msra.mxu0 0.0
    %1088 = vmatprep.subr.mxu0 0.0
    %1089 = vmatpush1.xpose.msra.mxu0 0.0
    %1090 = vmatprep.subr.mxu0 0.0
    %1091 = vmatpush1.xpose.msra.mxu0 0.0
    %1092 = vmatprep.subr.mxu0 0.0
    %1093 = vmatpush1.xpose.msra.mxu0 0.0
    %1094 = vmatprep.subr.mxu0 0.0
    %1095 = vmatpush1.xpose.msra.mxu0 0.0
    %1096 = vmatprep.mubr.f32.mxu0 0.0
    %1097 = vmatmul.mubr.f32.gmra.mrb[0].mxu0 %v1026
    %v1098 = vpop.f32.mrb[0].mxu0
    %v1099 = vadd.f32 0.0, %v1098
    %v1100 = vpop.f32.mrb[0].mxu0
    %1101 = vdwg.mxu0
    %v1102 = vmul.f32 %v1099, 0.25
    %v1103 = vsel %vm842, %v1102, -inf
    %1104 = vmax.xlane.f32.xlu0 %v1103
    %v1105 = vpop.xlane.xlu0 %1104
    %v1106 = vsub.f32 %v1102, %v1105
    %v1107 = vmul.f32 %v1106, 1.442695
    %v1108 = vpow.pop %v1107
    %v1109 = vmul.f32 %v1108, %v933
    %v1110 = vsel %vm842, %v1109, 0.0
    %1111 = vadd.xlane.f32.xlu0 %v1110
    %v1112 = vpop.xlane.xlu0 %1111
    %v1113 = vrcp.pop %v1112
    %v1114 = vmul.f32 %v1109, %v1113
    %1115 = vrot.lane.b32.xlu0 %v834, 80
    %v1116 = vpop.permute.xlu0 %1115
    %1117 = vrot.lane.b32.xlu0 %v837, 80
    %v1118 = vpop.permute.xlu0 %1117
    %v1122 = vsel %vm842, %v1114, 0
    %1124 = vmatprep.subr.mxu0 0.0
    %1125 = vmatpush1.msra.mxu0 %v1116
    %1126 = vmatprep.subr.mxu0 0.0
    %1127 = vmatpush1.msra.mxu0 %v1118
    %1128 = vmatprep.subr.mxu0 0.0
    %1129 = vmatpush1.msra.mxu0 0.0
    %1130 = vmatprep.subr.mxu0 0.0
    %1131 = vmatpush1.msra.mxu0 0.0
    %1132 = vmatprep.subr.mxu0 0.0
    %1133 = vmatpush1.msra.mxu0 0.0
    %1134 = vmatprep.subr.mxu0 0.0
    %1135 = vmatpush1.msra.mxu0 0.0
    %1136 = vmatprep.subr.mxu0 0.0
    %1137 = vmatpush1.msra.mxu0 0.0
    %1138 = vmatprep.subr.mxu0 0.0
    %1139 = vmatpush1.msra.mxu0 0.0
    %1140 = vmatprep.subr.mxu0 0.0
    %1141 = vmatpush1.msra.mxu0 0.0
    %1142 = vmatprep.subr.mxu0 0.0
    %1143 = vmatpush1.msra.mxu0 0.0
    %1144 = vmatprep.subr.mxu0 0.0
    %1145 = vmatpush1.msra.mxu0 0.0
    %1146 = vmatprep.subr.mxu0 0.0
    %1147 = vmatpush1.msra.mxu0 0.0
    %1148 = vmatprep.subr.mxu0 0.0
    %1149 = vmatpush1.msra.mxu0 0.0
    %1150 = vmatprep.subr.mxu0 0.0
    %1151 = vmatpush1.msra.mxu0 0.0
    %1152 = vmatprep.subr.mxu0 0.0
    %1153 = vmatpush1.msra.mxu0 0.0
    %1154 = vmatprep.subr.mxu0 0.0
    %1155 = vmatpush1.msra.mxu0 0.0
    %1156 = vmatprep.subr.mxu0 0.0
    %1157 = vmatpush1.msra.mxu0 0.0
    %1158 = vmatprep.subr.mxu0 0.0
    %1159 = vmatpush1.msra.mxu0 0.0
    %1160 = vmatprep.subr.mxu0 0.0
    %1161 = vmatpush1.msra.mxu0 0.0
    %1162 = vmatprep.subr.mxu0 0.0
    %1163 = vmatpush1.msra.mxu0 0.0
    %1164 = vmatprep.subr.mxu0 0.0
    %1165 = vmatpush1.msra.mxu0 0.0
    %1166 = vmatprep.subr.mxu0 0.0
    %1167 = vmatpush1.msra.mxu0 0.0
    %1168 = vmatprep.subr.mxu0 0.0
    %1169 = vmatpush1.msra.mxu0 0.0
    %1170 = vmatprep.subr.mxu0 0.0
    %1171 = vmatpush1.msra.mxu0 0.0
    %1172 = vmatprep.subr.mxu0 0.0
    %1173 = vmatpush1.msra.mxu0 0.0
    %1174 = vmatprep.subr.mxu0 0.0
    %1175 = vmatpush1.msra.mxu0 0.0
    %1176 = vmatprep.subr.mxu0 0.0
    %1177 = vmatpush1.msra.mxu0 0.0
    %1178 = vmatprep.subr.mxu0 0.0
    %1179 = vmatpush1.msra.mxu0 0.0
    %1180 = vmatprep.subr.mxu0 0.0
    %1181 = vmatpush1.msra.mxu0 0.0
    %1182 = vmatprep.subr.mxu0 0.0
    %1183 = vmatpush1.msra.mxu0 0.0
    %1184 = vmatprep.subr.mxu0 0.0
    %1185 = vmatpush1.msra.mxu0 0.0
    %1186 = vmatprep.subr.mxu0 0.0
    %1187 = vmatpush1.msra.mxu0 0.0
    %1188 = vmatprep.mubr.f32.mxu0 0.0
    %1189 = vmatmul.mubr.f32.gmra.mrb[0].mxu0 %v1122
    %v1190 = vpop.f32.mrb[0].mxu0
    %v1191 = vadd.f32 0.0, %v1190
    %v1192 = vpop.f32.mrb[0].mxu0
    %1193 = vdwg.mxu0
    %1195 = vrot.lane.b32.xlu0 %v1191, 16
    %v1196 = vpop.permute.xlu0 %1195
    %v1198 = vsel %vm842, %v1017, %v1196
    %vm1199 = vcmask 261120
    %1200 = vst.msk [vmem:[#allocation5] sm:$0xff] %vm1199, %v1198
    // Predicated region
    $region30: #{_lta_pallas.1} parent=1 // pred_check
      _
    $region31: #{_lta_pallas.1} parent=1 // pred_check_branch
      %1202 = sbr.rel (0) target = $region33
    $region32: #{_lta_pallas.1} parent=1 // pred_region
      %s1204 = ssub.s32 128, 128
      %1205 = vsyncadd [#allocation4], %s1204
      %s1207 = sshll.u32 [#allocation5], 4
      %s1208 = int_to_ptr.vmem [resolvable:$true] %s1207
      %1210 = dma.vmem_to_hbm [thread:$0]  %s1208, 128, %s6, [#allocation4]
    $region33: #{_lta_pallas.1} parent=1 // pred_fallthru
      _
    // Predicated region
    $region34: #{_lta_pallas.1} parent=1 // pred_check
      _
    $region35: #{_lta_pallas.1} parent=1 // pred_check_branch
      %1212 = sbr.rel (0) target = $region37
    $region36: #{_lta_pallas.1} parent=1 // pred_region
      %1213 = dma.done [#allocation4], 128
    $region37: #{_lta_pallas.1} parent=1 // pred_fallthru
      _
    %1214 = vsyncpa [#allocation3], 1
    %1215 = vsyncpa [#allocation4], 1

</llo_original>
